<compile_context>
chip_gen: v7x
topology: tpu7x:2x2x1
jax: 0.10.0
libtpu: 0.0.40
codegen_flags: <defaults>
</compile_context>

<pallas_src>
import functools

import jax
import jax.numpy as jnp
from jax.experimental import pallas as pl
from jax.experimental.pallas import tpu as pltpu


def _learnt_prototypes_kernel(x_ref, wt_ref, proto_ref, p2_ref, out_ref, *, squared):
    # x_ref:     (1, C_in, tn)  channel-major pixel tile
    # wt_ref:    (emb, C_in)    transposed 1x1-conv weight (resident)
    # proto_ref: (P, emb)       learnt prototypes (resident)
    # p2_ref:    (P, 1)         precomputed ||p||^2 (resident)
    # out_ref:   (1, P, tn)     -(squared) euclidean distances (lane-dense in tn)
    x = x_ref[0]                                                         # (C_in, tn)

    # Feature extractor hot path: 1x1 conv == channel-mixing matmul (MXU).
    e = jnp.dot(wt_ref[...], x, preferred_element_type=jnp.float32)     # (emb, tn)

    # Pairwise squared distance via ||p||^2 + ||e||^2 - 2 p.e (MXU cross term).
    ep = jnp.dot(proto_ref[...], e, preferred_element_type=jnp.float32)  # (P, tn)
    e2 = jnp.sum(e * e, axis=0, keepdims=True)                           # (1, tn)
    d2 = jnp.maximum((p2_ref[...] - 2.0 * ep) + e2, 0.0)                 # (P, tn)

    dists = d2 if squared else jnp.sqrt(d2)
    out_ref[0] = (-dists).astype(out_ref.dtype)
    # TODO(synk): dist='cosine' branch (1 - CosineSimilarity) not implemented;
    # only the default euclidean path is provided.


def learnt_prototypes_forward(x_nchw, conv_w, prototypes, *, squared=True,
                              max_tile=2048):
    """x_nchw: (b, c_in, h, w).  Returns (b, n_prototypes, h, w) = -dists."""
    b, c_in, h, w = x_nchw.shape
    n_proto, emb_dim = prototypes.shape
    assert conv_w.shape == (c_in, emb_dim)

    hw = h * w
    # Channel-major view: NCHW is already (b, C_in, h*w) after a free reshape,
    # with the same hw ordering as torch's view/transpose sequence.
    x_cm = x_nchw.reshape(b, c_in, hw)

    # Lane-dense spatial tile: a multiple of 128, capped (fits v7x 64 MiB VMEM
    # with large margin: per-step VMEM is ~ (C_in + P) * tn * 4 B double-buffered).
    tn = min(max_tile, -(-hw // 128) * 128)
    hw_pad = -(-hw // tn) * tn
    if hw_pad != hw:
        # Ragged tail: pad spatial dim; padded columns are sliced off afterwards.
        x_cm = jnp.pad(x_cm, ((0, 0), (0, 0), (0, hw_pad - hw)))

    # Hoist prototype-side precompute out of the kernel (done once, not per tile).
    w_t = jnp.transpose(conv_w).astype(jnp.float32)          # (emb, C_in)
    protos = prototypes.astype(jnp.float32)                  # (P, emb)
    p2 = jnp.sum(protos * protos, axis=-1, keepdims=True)    # (P, 1)

    kernel = functools.partial(_learnt_prototypes_kernel, squared=squared)

    out_cm = pl.pallas_call(
        kernel,
        out_shape=jax.ShapeDtypeStruct((b, n_proto, hw_pad), jnp.float32),
        grid=(b, hw_pad // tn),
        in_specs=[
            pl.BlockSpec((1, c_in, tn), lambda bi, ti: (bi, 0, ti)),      # pixel tile
            pl.BlockSpec((emb_dim, c_in), lambda bi, ti: (0, 0)),         # W^T resident
            pl.BlockSpec((n_proto, emb_dim), lambda bi, ti: (0, 0)),      # prototypes
            pl.BlockSpec((n_proto, 1), lambda bi, ti: (0, 0)),            # ||p||^2
        ],
        out_specs=pl.BlockSpec((1, n_proto, tn), lambda bi, ti: (bi, 0, ti)),
        compiler_params=pltpu.CompilerParams(
            dimension_semantics=("parallel", "parallel"),
            vmem_limit_bytes=32 * 1024 * 1024,
        ),
    )(x_cm, w_t, protos, p2)

    if hw_pad != hw:
        out_cm = out_cm[:, :, :hw]
    # (b, P, hw) -> (b, P, h, w): pure reshape, no transpose pass.
    return out_cm.reshape(b, n_proto, h, w)


def _reference(x_nchw, conv_w, prototypes, squared=True):
    """Pure-JAX reference mirroring the PyTorch forward."""
    b, c_in, h, w = x_nchw.shape
    n_proto, emb_dim = prototypes.shape
    e = jnp.einsum("bchw,ce->behw", x_nchw, conv_w)            # (b, emb, h, w)
    e = e.reshape(b, emb_dim, h * w).transpose(0, 2, 1).reshape(b * h * w, emb_dim)
    diff = e[:, None, :] - prototypes[None, :, :]
    dists = jnp.linalg.norm(diff, axis=-1)
    if squared:
        dists = dists ** 2
    dists = dists.reshape(b, h * w, n_proto).transpose(0, 2, 1).reshape(b, n_proto, h, w)
    return -dists


if __name__ == "__main__":
    key = jax.random.PRNGKey(0)
    k_x, k_w, k_p = jax.random.split(key, 3)

    b, c_in, h, w = 2, 4, 16, 16
    embedding_dim = 32
    n_prototypes = 16

    x = jax.random.normal(k_x, (b, c_in, h, w), dtype=jnp.float32)
    conv_w = jax.random.normal(k_w, (c_in, embedding_dim), dtype=jnp.float32) * 0.1
    # torch.rand -> uniform [0, 1)
    prototypes = jax.random.uniform(k_p, (n_prototypes, embedding_dim), dtype=jnp.float32)

    out = learnt_prototypes_forward(x, conv_w, prototypes, squared=True)
    out = jax.block_until_ready(out)

    ref = _reference(x, conv_w, prototypes, squared=True)
    assert out.shape == (b, n_prototypes, h, w)
    assert jnp.allclose(out, ref, atol=1e-3, rtol=1e-3), float(jnp.max(jnp.abs(out - ref)))

    print("KERNEL_OK")
</pallas_src>

<mosaic_0001>
module attributes {stable_mosaic.version = 11 : i64} {
  func.func @_learnt_prototypes_kernel(%arg0: i32, %arg1: i32, %arg2: memref<1x4x256xf32, #tpu.memory_space<vmem>>, %arg3: memref<32x4xf32, #tpu.memory_space<vmem>>, %arg4: memref<16x32xf32, #tpu.memory_space<vmem>>, %arg5: memref<16x1xf32, #tpu.memory_space<vmem>>, %arg6: memref<1x16x256xf32, #tpu.memory_space<vmem>>) attributes {dimension_semantics = [#tpu.dimension_semantics<parallel>, #tpu.dimension_semantics<parallel>], iteration_bounds = array<i64: 2, 1>, scalar_prefetch = 0 : i64, scratch_operands = 0 : i64, tpu.core_type = #tpu.core_type<tc>, window_params = [{transform_indices = @transform_0, window_bounds = array<i64: 1, 4, 256>}, {pipeline_mode = #tpu.pipeline_mode<synchronous>, transform_indices = @transform_1, window_bounds = array<i64: 32, 4>}, {pipeline_mode = #tpu.pipeline_mode<synchronous>, transform_indices = @transform_2, window_bounds = array<i64: 16, 32>}, {pipeline_mode = #tpu.pipeline_mode<synchronous>, transform_indices = @transform_3, window_bounds = array<i64: 16, 1>}, {transform_indices = @transform_4, window_bounds = array<i64: 1, 16, 256>}]} {
    %c0 = arith.constant 0 : index
    %c0_0 = arith.constant 0 : index
    %c0_1 = arith.constant 0 : index
    %0 = vector.load %arg2[%c0, %c0_0, %c0_1] : memref<1x4x256xf32, #tpu.memory_space<vmem>>, vector<1x4x256xf32>
    %1 = vector.shape_cast %0 : vector<1x4x256xf32> to vector<4x256xf32>
    %c0_2 = arith.constant 0 : index
    %c0_3 = arith.constant 0 : index
    %2 = vector.load %arg3[%c0_2, %c0_3] : memref<32x4xf32, #tpu.memory_space<vmem>>, vector<32x4xf32>
    %cst = arith.constant dense<0.000000e+00> : vector<32x256xf32>
    %3 = tpu.matmul %2, %1, %cst {dimension_numbers = #tpu.dot_dimension_numbers<[1], [0], [0], [1], [0, 0, 1, 1], [], []>} : vector<32x4xf32>, vector<4x256xf32>, vector<32x256xf32> -> vector<32x256xf32>
    %c0_4 = arith.constant 0 : index
    %c0_5 = arith.constant 0 : index
    %4 = vector.load %arg4[%c0_4, %c0_5] : memref<16x32xf32, #tpu.memory_space<vmem>>, vector<16x32xf32>
    %cst_6 = arith.constant dense<0.000000e+00> : vector<16x256xf32>
    %5 = tpu.matmul %4, %3, %cst_6 {dimension_numbers = #tpu.dot_dimension_numbers<[1], [0], [0], [1], [0, 0, 1, 1], [], []>} : vector<16x32xf32>, vector<32x256xf32>, vector<16x256xf32> -> vector<16x256xf32>
    %6 = arith.mulf %3, %3 : vector<32x256xf32>
    %cst_7 = arith.constant dense<0.000000e+00> : vector<256xf32>
    %7 = vector.multi_reduction <add>, %6, %cst_7 [0] : vector<32x256xf32> to vector<256xf32>
    %8 = vector.shape_cast %7 : vector<256xf32> to vector<1x256xf32>
    %c0_8 = arith.constant 0 : index
    %c0_9 = arith.constant 0 : index
    %9 = vector.load %arg5[%c0_8, %c0_9] : memref<16x1xf32, #tpu.memory_space<vmem>>, vector<16x1xf32>
    %cst_10 = arith.constant 2.000000e+00 : f32
    %10 = vector.broadcast %cst_10 : f32 to vector<16x256xf32>
    %11 = arith.mulf %10, %5 : vector<16x256xf32>
    %12 = vector.broadcast %9 : vector<16x1xf32> to vector<16x256xf32>
    %13 = arith.subf %12, %11 : vector<16x256xf32>
    %14 = vector.broadcast %8 : vector<1x256xf32> to vector<16x256xf32>
    %15 = arith.addf %13, %14 : vector<16x256xf32>
    %cst_11 = arith.constant 0.000000e+00 : f32
    %16 = vector.broadcast %cst_11 : f32 to vector<16x256xf32>
    %17 = arith.maximumf %15, %16 : vector<16x256xf32>
    %cst_12 = arith.constant 0.000000e+00 : f32
    %18 = vector.broadcast %cst_12 : f32 to vector<16x256xf32>
    %19 = arith.subf %18, %17 : vector<16x256xf32>
    %c0_13 = arith.constant 0 : index
    %c0_14 = arith.constant 0 : index
    %c0_15 = arith.constant 0 : index
    %20 = vector.load %arg6[%c0_13, %c0_14, %c0_15] : memref<1x16x256xf32, #tpu.memory_space<vmem>>, vector<1x16x256xf32>
    %21 = vector.shape_cast %20 : vector<1x16x256xf32> to vector<16x256xf32>
    %22 = vector.shape_cast %19 : vector<16x256xf32> to vector<1x16x256xf32>
    tpu.vector_store %arg6[%c0_13, %c0_14, %c0_15], %22 {strides = array<i32>} : memref<1x16x256xf32, #tpu.memory_space<vmem>>, vector<1x16x256xf32>,
    return
  }
  func.func @transform_0(%arg0: i32, %arg1: i32) -> (i32, i32, i32) {
    %c0_i32 = arith.constant 0 : i32
    %c0_i32_0 = arith.constant 0 : i32
    return %arg0, %c0_i32, %arg1 : i32, i32, i32
  }
  func.func @transform_1(%arg0: i32, %arg1: i32) -> (i32, i32) {
    %c0_i32 = arith.constant 0 : i32
    %c0_i32_0 = arith.constant 0 : i32
    %c0_i32_1 = arith.constant 0 : i32
    return %c0_i32, %c0_i32_0 : i32, i32
  }
  func.func @transform_2(%arg0: i32, %arg1: i32) -> (i32, i32) {
    %c0_i32 = arith.constant 0 : i32
    %c0_i32_0 = arith.constant 0 : i32
    %c0_i32_1 = arith.constant 0 : i32
    return %c0_i32, %c0_i32_0 : i32, i32
  }
  func.func @transform_3(%arg0: i32, %arg1: i32) -> (i32, i32) {
    %c0_i32 = arith.constant 0 : i32
    %c0_i32_0 = arith.constant 0 : i32
    %c0_i32_1 = arith.constant 0 : i32
    return %c0_i32, %c0_i32_0 : i32, i32
  }
  func.func @transform_4(%arg0: i32, %arg1: i32) -> (i32, i32, i32) {
    %c0_i32 = arith.constant 0 : i32
    %c0_i32_0 = arith.constant 0 : i32
    return %arg0, %c0_i32, %arg1 : i32, i32, i32
  }
}

</mosaic_0001>

<llo_original>
// kernel: tpu_custom_call.1
$region0: #{tpu_custom_call.1}
  #allocation0 [shape = 'u32[]', space=smem, size = 0x4, offset = 0x4, fixed_abs, tag = 'smem constant byte address 0x4 - core index']
  #allocation1 [shape = 'u32[144,128]{1,0:T(1,128)}', space=vmem, size = 0x12000, scoped, tag = 'internal scratch']
  %s0 = inlined_call_operand.vmem [shape: f32[2,4,256], index: 0, kind: input, shape index: {}]
  %s1 = inlined_call_operand.vmem [shape: f32[32,4], index: 1, kind: input, shape index: {}]
  %s2 = inlined_call_operand.vmem [shape: f32[16,32], index: 2, kind: input, shape index: {}]
  %s3 = inlined_call_operand.vmem [shape: f32[16,1], index: 3, kind: input, shape index: {}]
  %s4 = inlined_call_operand.hbm [shape: f32[2,16,256], index: 4, kind: output, shape index: {}]
  %s5 = sld [smem:[#allocation0]]
  $region49: #{tpu_custom_call.1} parent=0
    _
  %s7 = ssub.s32 1, %s5
  %s8 = scalar_select 0, %s7, %s5
  $region1: #{tpu_custom_call.1} parent=0
    #allocation2 [shape = 'u8[32768]{0}', space=vmem, size = 0x8000, scoped, tag = 'output window, operand 0']
    #allocation3 [shape = 's32[2]{0}', space=sflag, size = 0x8, scoped, tag = 'scoped memory for tpu_custom_call.1']
    %9 = vsyncpa [#allocation3], 0
    %s10 = scalar_lea.sflag [#allocation3], 1
    %11 = vsyncpa %s10, 0
    loop: start=0, step=1, limit=4
    $region2: #{tpu_custom_call.1} parent=1 // loop_pre_header
      _
    $region3: #{tpu_custom_call.1} parent=1 // loop_header
      %s13 = sphi 0, %s17
      %p14 = scmp.ge.s32.totalorder %s13, 4
      %s20 = sphi 0, %s32
      %s21 = sphi 0, %s28
      %s22 = sphi 0, %s20
      %s23 = sphi 0, %s21
      %s24 = sphi 0, %s22
      %s25 = sphi 0, %s23
      %s37 = sphi 0, %s39
      %s40 = sphi 0, %s37
      %s41 = sphi 0, %s40
      %s57 = sphi 0, %s41
      %s61 = sphi 0, %s61
      %s63 = sphi 0, %s61
      %s64 = sphi 0, %s63
      %s78 = sphi 0, %s64
      %s82 = sphi 0, %s82
      %s84 = sphi 0, %s82
      %s85 = sphi 0, %s84
      %s99 = sphi 0, %s85
      %s103 = sphi 0, %s103
      %s105 = sphi 0, %s103
      %s106 = sphi 0, %s105
      %s120 = sphi 0, %s106
      %s128 = sphi 0, %s130
      %s131 = sphi 0, %s128
      %s132 = sphi 0, %s131
      %s148 = sphi 0, %s132
    $region4: #{tpu_custom_call.1} parent=1 // loop_header_branch
      %16 = sbr.rel (%p14) target = $region8
    $region5: #{tpu_custom_call.1} parent=1 // loop_body
      %s18 = ssub.s32 %s13, 1
      %s19 = ssub.s32 %s13, 2
      %s26 = sadd.s32 1, %s21
      %p27 = scmp.ge.s32.totalorder %s26, 1
      %s28 = scalar_select %p27, 0, %s26
      %s29 = sadd.s32 1, %s20
      %s30 = scalar_select %p27, %s29, %s20
      %p31 = scmp.ge.s32.totalorder %s30, 2
      %s32 = scalar_select %p31, 0, %s30
      %s33 = ssub.s32 %s20, %s32
      %s34 = ssub.s32 %s21, %s28
      %s35 = sor.u32 %s33, %s34
      %p36 = scmp.eq.s32.totalorder %s35, 0
      %s38 = sadd.s32 %s37, 1
      %s39 = scalar_select %p36, %s37, %s38
      %p42 = pneg %p36
      %p43 = scmp.eq.s32.totalorder %s13, 1
      %p44 = por %p42, %p43
      %p45 = scmp.ne.s32.totalorder %s37, %s40
      %p46 = scmp.eq.s32.totalorder %s13, 0
      %p47 = por %p45, %p46
      %p48 = scmp.ne.s32.totalorder %s37, %s40
      %p49 = scmp.eq.s32.totalorder %s18, 1
      %p50 = por %p48, %p49
      %p51 = scmp.ne.s32.totalorder %s40, %s41
      %p52 = scmp.eq.s32.totalorder %s18, 0
      %p53 = por %p51, %p52
      %p54 = scmp.ne.s32.totalorder %s40, %s41
      %p55 = scmp.eq.s32.totalorder %s19, 1
      %p56 = por %p54, %p55
      %p58 = scmp.ne.s32.totalorder %s41, %s57
      %p59 = scmp.eq.s32.totalorder %s19, 0
      %p60 = por %p58, %p59
      %s62 = sadd.s32 %s61, 1
      %p65 = scmp.eq.s32.totalorder %s13, 1
      %p66 = scmp.ne.s32.totalorder %s61, %s63
      %p67 = scmp.eq.s32.totalorder %s13, 0
      %p68 = por %p66, %p67
      %p69 = scmp.ne.s32.totalorder %s61, %s63
      %p70 = scmp.eq.s32.totalorder %s18, 1
      %p71 = por %p69, %p70
      %p72 = scmp.ne.s32.totalorder %s63, %s64
      %p73 = scmp.eq.s32.totalorder %s18, 0
      %p74 = por %p72, %p73
      %p75 = scmp.ne.s32.totalorder %s63, %s64
      %p76 = scmp.eq.s32.totalorder %s19, 1
      %p77 = por %p75, %p76
      %p79 = scmp.ne.s32.totalorder %s64, %s78
      %p80 = scmp.eq.s32.totalorder %s19, 0
      %p81 = por %p79, %p80
      %s83 = sadd.s32 %s82, 1
      %p86 = scmp.eq.s32.totalorder %s13, 1
      %p87 = scmp.ne.s32.totalorder %s82, %s84
      %p88 = scmp.eq.s32.totalorder %s13, 0
      %p89 = por %p87, %p88
      %p90 = scmp.ne.s32.totalorder %s82, %s84
      %p91 = scmp.eq.s32.totalorder %s18, 1
      %p92 = por %p90, %p91
      %p93 = scmp.ne.s32.totalorder %s84, %s85
      %p94 = scmp.eq.s32.totalorder %s18, 0
      %p95 = por %p93, %p94
      %p96 = scmp.ne.s32.totalorder %s84, %s85
      %p97 = scmp.eq.s32.totalorder %s19, 1
      %p98 = por %p96, %p97
      %p100 = scmp.ne.s32.totalorder %s85, %s99
      %p101 = scmp.eq.s32.totalorder %s19, 0
      %p102 = por %p100, %p101
      %s104 = sadd.s32 %s103, 1
      %p107 = scmp.eq.s32.totalorder %s13, 1
      %p108 = scmp.ne.s32.totalorder %s103, %s105
      %p109 = scmp.eq.s32.totalorder %s13, 0
      %p110 = por %p108, %p109
      %p111 = scmp.ne.s32.totalorder %s103, %s105
      %p112 = scmp.eq.s32.totalorder %s18, 1
      %p113 = por %p111, %p112
      %p114 = scmp.ne.s32.totalorder %s105, %s106
      %p115 = scmp.eq.s32.totalorder %s18, 0
      %p116 = por %p114, %p115
      %p117 = scmp.ne.s32.totalorder %s105, %s106
      %p118 = scmp.eq.s32.totalorder %s19, 1
      %p119 = por %p117, %p118
      %p121 = scmp.ne.s32.totalorder %s106, %s120
      %p122 = scmp.eq.s32.totalorder %s19, 0
      %p123 = por %p121, %p122
      %s124 = ssub.s32 %s20, %s32
      %s125 = ssub.s32 %s21, %s28
      %s126 = sor.u32 %s124, %s125
      %p127 = scmp.eq.s32.totalorder %s126, 0
      %s129 = sadd.s32 %s128, 1
      %s130 = scalar_select %p127, %s128, %s129
      %p133 = pneg %p127
      %p134 = scmp.eq.s32.totalorder %s13, 1
      %p135 = por %p133, %p134
      %p136 = scmp.ne.s32.totalorder %s128, %s131
      %p137 = scmp.eq.s32.totalorder %s13, 0
      %p138 = por %p136, %p137
      %p139 = scmp.ne.s32.totalorder %s128, %s131
      %p140 = scmp.eq.s32.totalorder %s18, 1
      %p141 = por %p139, %p140
      %p142 = scmp.ne.s32.totalorder %s131, %s132
      %p143 = scmp.eq.s32.totalorder %s18, 0
      %p144 = por %p142, %p143
      %p145 = scmp.ne.s32.totalorder %s131, %s132
      %p146 = scmp.eq.s32.totalorder %s19, 1
      %p147 = por %p145, %p146
      %p149 = scmp.ne.s32.totalorder %s132, %s148
      %p150 = scmp.eq.s32.totalorder %s19, 0
      %p151 = por %p149, %p150
      %p152 = scmp.le.s32.totalorder 1, %s13
      %p153 = scmp.lt.s32.totalorder %s13, 3
      %p154 = pnand %p152, %p153
      %p155 = pneg %p154
      // Predicated region
      $region9: #{tpu_custom_call.1} parent=5 // pred_check
        _
      $region10: #{tpu_custom_call.1} parent=5 // pred_check_branch
        %157 = sbr.rel (%p154) target = $region12
      $region11: #{tpu_custom_call.1} parent=5 // pred_region
        %s158 = ssub.s32 %s13, 1
        // Predicated region
        $region13: #{tpu_custom_call.1} parent=11 // pred_check
          %p159 = pneg %p74
        $region14: #{tpu_custom_call.1} parent=11 // pred_check_branch
          %161 = sbr.rel (%p159) target = $region16
        $region15: #{tpu_custom_call.1} parent=11 // pred_region
          _
        $region16: #{tpu_custom_call.1} parent=11 // pred_fallthru
          _
        // Predicated region
        $region17: #{tpu_custom_call.1} parent=11 // pred_check
          %p162 = pneg %p95
        $region18: #{tpu_custom_call.1} parent=11 // pred_check_branch
          %164 = sbr.rel (%p162) target = $region20
        $region19: #{tpu_custom_call.1} parent=11 // pred_region
          _
        $region20: #{tpu_custom_call.1} parent=11 // pred_fallthru
          _
        // Predicated region
        $region21: #{tpu_custom_call.1} parent=11 // pred_check
          %p165 = pneg %p116
        $region22: #{tpu_custom_call.1} parent=11 // pred_check_branch
          %167 = sbr.rel (%p165) target = $region24
        $region23: #{tpu_custom_call.1} parent=11 // pred_region
          _
        $region24: #{tpu_custom_call.1} parent=11 // pred_fallthru
          _
      $region12: #{tpu_custom_call.1} parent=5 // pred_fallthru
        _
      %p168 = scmp.lt.s32.totalorder %s13, 2
      // Predicated region
      $region25: #{tpu_custom_call.1} parent=5 // pred_check
        %p169 = pneg %p168
      $region26: #{tpu_custom_call.1} parent=5 // pred_check_branch
        %171 = sbr.rel (%p169) target = $region28
      $region27: #{tpu_custom_call.1} parent=5 // pred_region
        // Predicated region
        $region29: #{tpu_custom_call.1} parent=27 // pred_check
          %p172 = pneg %p47
        $region30: #{tpu_custom_call.1} parent=27 // pred_check_branch
          %174 = sbr.rel (%p172) target = $region32
        $region31: #{tpu_custom_call.1} parent=27 // pred_region
          %s175 = smul.u32 2, %s21
          %p176 = scmp.lt.s32.totalorder %s20, 1
          %s177 = scalar_select %p176, %s20, 1
          %p178 = scmp.lt.s32.totalorder %s175, 1
          %s179 = scalar_select %p178, %s175, 1
          %s180 = smul.addr %s177, 2
          %s181 = sadd.s32 %s179, %s180
          %s182 = smul.addr %s181, 4
          %s183 = scalar_lea.vmem %s0, %s182
          %s184 = smul.u32 2, %s21
        $region32: #{tpu_custom_call.1} parent=27 // pred_fallthru
          _
      $region28: #{tpu_custom_call.1} parent=5 // pred_fallthru
        _
      %p185 = scmp.le.s32.totalorder 1, %s13
      %p186 = scmp.lt.s32.totalorder %s13, 3
      %p187 = pnand %p185, %p186
      %p188 = pneg %p187
      // Predicated region
      $region33: #{tpu_custom_call.1} parent=5 // pred_check
        _
      $region34: #{tpu_custom_call.1} parent=5 // pred_check_branch
        %190 = sbr.rel (%p187) target = $region36
      $region35: #{tpu_custom_call.1} parent=5 // pred_region
        %s191 = ssub.s32 %s13, 1
        %s192 = smul.u32 2, %s23
        %p193 = scmp.lt.s32.totalorder %s22, 1
        %s194 = scalar_select %p193, %s22, 1
        %p195 = scmp.lt.s32.totalorder %s192, 1
        %s196 = scalar_select %p195, %s192, 1
        %s197 = smul.addr %s194, 2
        %s198 = sadd.s32 %s196, %s197
        %s199 = smul.addr %s198, 4
        %s200 = scalar_lea.vmem %s0, %s199
        %p201 = pneg %p53
        %p202 = pneg %p50
        %p203 = pneg %p74
        %p204 = pneg %p71
        %p205 = pneg %p95
        %p206 = pneg %p92
        %p207 = pneg %p116
        %p208 = pneg %p113
        %p209 = pneg %p144
        %p210 = pneg %p141
        %s211 = sand.u32 %s131, 1
        %s212 = scalar_lea.sflag [#allocation3], %s211
        %s213 = sand.u32 %s131, 1
        %s214 = smul.addr %s213, 32
        %s215 = scalar_lea.vmem [#allocation2], %s214
        %s216 = smul.u32 2, %s23
        %p217 = scmp.lt.s32.totalorder %s22, 1
        %s218 = scalar_select %p217, %s22, 1
        %p219 = scmp.lt.s32.totalorder %s216, 1
        %s220 = scalar_select %p219, %s216, 1
        %s221 = smul.addr %s218, 2
        %s222 = sadd.s32 %s220, %s221
        %s223 = smul.addr %s222, 4
        %s224 = scalar_lea.vmem %s0, %s223
        %s225 = smul.u32 2, %s23
        %s226 = smul.u32 2, %s23
        %v227 = vld [vmem:[%s224] sm:$0xff]
        %v228 = vld [vmem:[%s1] sm:$0xff]
        %v229 = vld [vmem:[%s1 + $0x8] sm:$0xff]
        %v230 = vld [vmem:[%s1 + $0x10] sm:$0xff]
        %v231 = vld [vmem:[%s1 + $0x18] sm:$0xff]
        %v233 = vcombine.high %v227, %v227
        %vm234 = vcmask 31744
        %v236 = vsel %vm234, %v228, 0
        %v239 = vsel %vm234, %v229, 0
        %v242 = vsel %vm234, %v230, 0
        %v245 = vsel %vm234, %v231, 0
        %vm247 = vcmask 1043456
        %v248 = vsel %vm247, %v227, 0
        %v250 = vsel %vm247, %v233, 0
        %252 = vmatprep.subr.mxu0 %v250
        %253 = vmatpush1.msra.mxu0 %v248
        %254 = vmatprep.subr.mxu0 0.0
        %255 = vmatpush1.msra.mxu0 0.0
        %256 = vmatprep.subr.mxu0 0.0
        %257 = vmatpush1.msra.mxu0 0.0
        %258 = vmatprep.subr.mxu0 0.0
        %259 = vmatpush1.msra.mxu0 0.0
        %260 = vmatprep.subr.mxu0 0.0
        %261 = vmatpush1.msra.mxu0 0.0
        %262 = vmatprep.subr.mxu0 0.0
        %263 = vmatpush1.msra.mxu0 0.0
        %264 = vmatprep.subr.mxu0 0.0
        %265 = vmatpush1.msra.mxu0 0.0
        %266 = vmatprep.subr.mxu0 0.0
        %267 = vmatpush1.msra.mxu0 0.0
        %268 = vmatprep.subr.mxu0 0.0
        %269 = vmatpush1.msra.mxu0 0.0
        %270 = vmatprep.subr.mxu0 0.0
        %271 = vmatpush1.msra.mxu0 0.0
        %272 = vmatprep.subr.mxu0 0.0
        %273 = vmatpush1.msra.mxu0 0.0
        %274 = vmatprep.subr.mxu0 0.0
        %275 = vmatpush1.msra.mxu0 0.0
        %276 = vmatprep.subr.mxu0 0.0
        %277 = vmatpush1.msra.mxu0 0.0
        %278 = vmatprep.subr.mxu0 0.0
        %279 = vmatpush1.msra.mxu0 0.0
        %280 = vmatprep.subr.mxu0 0.0
        %281 = vmatpush1.msra.mxu0 0.0
        %282 = vmatprep.subr.mxu0 0.0
        %283 = vmatpush1.msra.mxu0 0.0
        %284 = vmatprep.subr.mxu0 0.0
        %285 = vmatpush1.msra.mxu0 0.0
        %286 = vmatprep.subr.mxu0 0.0
        %287 = vmatpush1.msra.mxu0 0.0
        %288 = vmatprep.subr.mxu0 0.0
        %289 = vmatpush1.msra.mxu0 0.0
        %290 = vmatprep.subr.mxu0 0.0
        %291 = vmatpush1.msra.mxu0 0.0
        %292 = vmatprep.subr.mxu0 0.0
        %293 = vmatpush1.msra.mxu0 0.0
        %294 = vmatprep.subr.mxu0 0.0
        %295 = vmatpush1.msra.mxu0 0.0
        %296 = vmatprep.subr.mxu0 0.0
        %297 = vmatpush1.msra.mxu0 0.0
        %298 = vmatprep.subr.mxu0 0.0
        %299 = vmatpush1.msra.mxu0 0.0
        %300 = vmatprep.subr.mxu0 0.0
        %301 = vmatpush1.msra.mxu0 0.0
        %302 = vmatprep.subr.mxu0 0.0
        %303 = vmatpush1.msra.mxu0 0.0
        %304 = vmatprep.subr.mxu0 0.0
        %305 = vmatpush1.msra.mxu0 0.0
        %306 = vmatprep.subr.mxu0 0.0
        %307 = vmatpush1.msra.mxu0 0.0
        %308 = vmatprep.subr.mxu0 0.0
        %309 = vmatpush1.msra.mxu0 0.0
        %310 = vmatprep.subr.mxu0 0.0
        %311 = vmatpush1.msra.mxu0 0.0
        %312 = vmatprep.subr.mxu0 0.0
        %313 = vmatpush1.msra.mxu0 0.0
        %314 = vmatprep.subr.mxu0 0.0
        %315 = vmatpush1.msra.mxu0 0.0
        %316 = vmatprep.mubr.f32.mxu0 0.0
        %317 = vmatmul.mubr.f32.gmra.mrb[0].mxu0 %v236
        %v318 = vpop.f32.mrb[0].mxu0
        %v319 = vadd.f32 0.0, %v318
        %v320 = vpop.f32.mrb[0].mxu0
        %v321 = vadd.f32 0.0, %v320
        %322 = vmatprep.mubr.f32.mxu0 0.0
        %323 = vmatmul.mubr.f32.gmra.mrb[0].mxu0 %v239
        %v324 = vpop.f32.mrb[0].mxu0
        %v325 = vadd.f32 0.0, %v324
        %v326 = vpop.f32.mrb[0].mxu0
        %v327 = vadd.f32 0.0, %v326
        %328 = vmatprep.mubr.f32.mxu0 0.0
        %329 = vmatmul.mubr.f32.gmra.mrb[0].mxu0 %v242
        %v330 = vpop.f32.mrb[0].mxu0
        %v331 = vadd.f32 0.0, %v330
        %v332 = vpop.f32.mrb[0].mxu0
        %v333 = vadd.f32 0.0, %v332
        %334 = vmatprep.mubr.f32.mxu0 0.0
        %335 = vmatmul.mubr.f32.gmra.mrb[0].mxu0 %v245
        %v336 = vpop.f32.mrb[0].mxu0
        %v337 = vadd.f32 0.0, %v336
        %v338 = vpop.f32.mrb[0].mxu0
        %v339 = vadd.f32 0.0, %v338
        %340 = vdwg.mxu0
        %v341 = vld [vmem:[%s2] sm:$0xff]
        %v342 = vld [vmem:[%s2 + $0x8] sm:$0xff]
        %vm343 = vcmask 261120
        %v345 = vsel %vm343, %v341, 0
        %v348 = vsel %vm343, %v342, 0
        %350 = vmatprep.subr.mxu0 %v321
        %351 = vmatpush1.msra.mxu0 %v319
        %352 = vmatprep.subr.mxu0 %v327
        %353 = vmatpush1.msra.mxu0 %v325
        %354 = vmatprep.subr.mxu0 %v333
        %355 = vmatpush1.msra.mxu0 %v331
        %356 = vmatprep.subr.mxu0 %v339
        %357 = vmatpush1.msra.mxu0 %v337
        %358 = vmatprep.subr.mxu0 0.0
        %359 = vmatpush1.msra.mxu0 0.0
        %360 = vmatprep.subr.mxu0 0.0
        %361 = vmatpush1.msra.mxu0 0.0
        %362 = vmatprep.subr.mxu0 0.0
        %363 = vmatpush1.msra.mxu0 0.0
        %364 = vmatprep.subr.mxu0 0.0
        %365 = vmatpush1.msra.mxu0 0.0
        %366 = vmatprep.subr.mxu0 0.0
        %367 = vmatpush1.msra.mxu0 0.0
        %368 = vmatprep.subr.mxu0 0.0
        %369 = vmatpush1.msra.mxu0 0.0
        %370 = vmatprep.subr.mxu0 0.0
        %371 = vmatpush1.msra.mxu0 0.0
        %372 = vmatprep.subr.mxu0 0.0
        %373 = vmatpush1.msra.mxu0 0.0
        %374 = vmatprep.subr.mxu0 0.0
        %375 = vmatpush1.msra.mxu0 0.0
        %376 = vmatprep.subr.mxu0 0.0
        %377 = vmatpush1.msra.mxu0 0.0
        %378 = vmatprep.subr.mxu0 0.0
        %379 = vmatpush1.msra.mxu0 0.0
        %380 = vmatprep.subr.mxu0 0.0
        %381 = vmatpush1.msra.mxu0 0.0
        %382 = vmatprep.subr.mxu0 0.0
        %383 = vmatpush1.msra.mxu0 0.0
        %384 = vmatprep.subr.mxu0 0.0
        %385 = vmatpush1.msra.mxu0 0.0
        %386 = vmatprep.subr.mxu0 0.0
        %387 = vmatpush1.msra.mxu0 0.0
        %388 = vmatprep.subr.mxu0 0.0
        %389 = vmatpush1.msra.mxu0 0.0
        %390 = vmatprep.subr.mxu0 0.0
        %391 = vmatpush1.msra.mxu0 0.0
        %392 = vmatprep.subr.mxu0 0.0
        %393 = vmatpush1.msra.mxu0 0.0
        %394 = vmatprep.subr.mxu0 0.0
        %395 = vmatpush1.msra.mxu0 0.0
        %396 = vmatprep.subr.mxu0 0.0
        %397 = vmatpush1.msra.mxu0 0.0
        %398 = vmatprep.subr.mxu0 0.0
        %399 = vmatpush1.msra.mxu0 0.0
        %400 = vmatprep.subr.mxu0 0.0
        %401 = vmatpush1.msra.mxu0 0.0
        %402 = vmatprep.subr.mxu0 0.0
        %403 = vmatpush1.msra.mxu0 0.0
        %404 = vmatprep.subr.mxu0 0.0
        %405 = vmatpush1.msra.mxu0 0.0
        %406 = vmatprep.subr.mxu0 0.0
        %407 = vmatpush1.msra.mxu0 0.0
        %408 = vmatprep.subr.mxu0 0.0
        %409 = vmatpush1.msra.mxu0 0.0
        %410 = vmatprep.subr.mxu0 0.0
        %411 = vmatpush1.msra.mxu0 0.0
        %412 = vmatprep.subr.mxu0 0.0
        %413 = vmatpush1.msra.mxu0 0.0
        %414 = vmatprep.mubr.f32.mxu0 0.0
        %415 = vmatmul.mubr.f32.gmra.mrb[0].mxu0 %v345
        %v416 = vpop.f32.mrb[0].mxu0
        %v417 = vadd.f32 0.0, %v416
        %v418 = vpop.f32.mrb[0].mxu0
        %v419 = vadd.f32 0.0, %v418
        %420 = vmatprep.mubr.f32.mxu0 0.0
        %421 = vmatmul.mubr.f32.gmra.mrb[0].mxu0 %v348
        %v422 = vpop.f32.mrb[0].mxu0
        %v423 = vadd.f32 0.0, %v422
        %v424 = vpop.f32.mrb[0].mxu0
        %v425 = vadd.f32 0.0, %v424
        %426 = vdwg.mxu0
        %v427 = vmul.f32 %v319, %v319
        %v428 = vmul.f32 %v321, %v321
        %v429 = vmul.f32 %v325, %v325
        %v430 = vmul.f32 %v327, %v327
        %v431 = vmul.f32 %v331, %v331
        %v432 = vmul.f32 %v333, %v333
        %v433 = vmul.f32 %v337, %v337
        %v434 = vmul.f32 %v339, %v339
        %v435 = vadd.f32 %v427, %v429
        %v436 = vadd.f32 %v435, %v431
        %v437 = vadd.f32 %v436, %v433
        %v438 = vrot.slane %v437, 4
        %v439 = vadd.f32 %v437, %v438
        %v440 = vrot.slane %v439, 2
        %v441 = vadd.f32 %v439, %v440
        %v442 = vrot.slane %v441, 1
        %v443 = vadd.f32 %v441, %v442
        %v444 = vadd.f32 %v428, %v430
        %v445 = vadd.f32 %v444, %v432
        %v446 = vadd.f32 %v445, %v434
        %v447 = vrot.slane %v446, 4
        %v448 = vadd.f32 %v446, %v447
        %v449 = vrot.slane %v448, 2
        %v450 = vadd.f32 %v448, %v449
        %v451 = vrot.slane %v450, 1
        %v452 = vadd.f32 %v450, %v451
        %v453 = vld [vmem:[%s3] sm:$0xff]
        %v454 = vld [vmem:[%s3 + $0x8] sm:$0xff]
        %v455 = vmul.f32 %v417, 2.0
        %v456 = vmul.f32 %v419, 2.0
        %v457 = vmul.f32 %v423, 2.0
        %v458 = vmul.f32 %v425, 2.0
        %460 = vset.pattern.permute.xlu0 0
        %461 = vperm.xlu0 %460, %v453
        %v462 = vpop.permute.xlu0 %461
        %465 = vset.pattern.permute.xlu0 0
        %466 = vperm.xlu0 %465, %v454
        %v467 = vpop.permute.xlu0 %466
        %v469 = vsub.f32 %v462, %v455
        %v470 = vsub.f32 %v462, %v456
        %v471 = vsub.f32 %v467, %v457
        %v472 = vsub.f32 %v467, %v458
        %v473 = vadd.f32 %v469, %v443
        %v474 = vadd.f32 %v470, %v452
        %v475 = vadd.f32 %v471, %v443
        %v476 = vadd.f32 %v472, %v452
        %v477 = vmax.f32 %v473, 0.0
        %v478 = vmax.f32 %v474, 0.0
        %v479 = vmax.f32 %v475, 0.0
        %v480 = vmax.f32 %v476, 0.0
        %v481 = vsub.f32 0.0, %v477
        %v482 = vsub.f32 0.0, %v478
        %v483 = vsub.f32 0.0, %v479
        %v484 = vsub.f32 0.0, %v480
        %485 = vst [vmem:[%s215] sm:$0xff] %v481
        %486 = vst [vmem:[%s215 + $0x8] sm:$0xff] %v482
        %487 = vst [vmem:[%s215 + $0x10] sm:$0xff] %v483
        %488 = vst [vmem:[%s215 + $0x18] sm:$0xff] %v484
        %s489 = sand.u32 %s131, 1
        %s490 = scalar_lea.sflag [#allocation3], %s489
        %s491 = sand.u32 %s131, 1
        %s492 = smul.addr %s491, 32
        %s493 = scalar_lea.vmem [#allocation2], %s492
        // Predicated region
        $region37: #{tpu_custom_call.1} parent=35 // pred_check
          %p494 = pneg %p141
        $region38: #{tpu_custom_call.1} parent=35 // pred_check_branch
          %496 = sbr.rel (%p494) target = $region40
        $region39: #{tpu_custom_call.1} parent=35 // pred_region
          %s497 = smul.u32 2, %s23
          %s499 = ssub.s32 512, 512
          %500 = vsyncadd %s490, %s499
          %s501 = smul.addr %s22, 4
          %s502 = sadd.s32 %s497, %s501
          %s503 = smul.addr %s502, 128
          %s504 = scalar_lea.hbm %s4, %s503
          %s505 = sshll.u32 %s493, 4
          %s506 = int_to_ptr.vmem [resolvable:$true] %s505
          %511 = dma.vmem_to_hbm [thread:$0]  %s506, 512, %s504, %s490, 256, 256, 16
        $region40: #{tpu_custom_call.1} parent=35 // pred_fallthru
          _
      $region36: #{tpu_custom_call.1} parent=5 // pred_fallthru
        _
      %p512 = scmp.le.s32.totalorder 2, %s13
      // Predicated region
      $region41: #{tpu_custom_call.1} parent=5 // pred_check
        %p513 = pneg %p512
      $region42: #{tpu_custom_call.1} parent=5 // pred_check_branch
        %515 = sbr.rel (%p513) target = $region44
      $region43: #{tpu_custom_call.1} parent=5 // pred_region
        %s516 = ssub.s32 %s13, 2
        // Predicated region
        $region45: #{tpu_custom_call.1} parent=43 // pred_check
          %p517 = pneg %p147
        $region46: #{tpu_custom_call.1} parent=43 // pred_check_branch
          %519 = sbr.rel (%p517) target = $region48
        $region47: #{tpu_custom_call.1} parent=43 // pred_region
          %s520 = sand.u32 %s132, 1
          %s521 = scalar_lea.sflag [#allocation3], %s520
          %s522 = sand.u32 %s132, 1
          %s523 = smul.addr %s522, 32
          %s524 = scalar_lea.vmem [#allocation2], %s523
          %525 = dma.done %s521, 512
        $region48: #{tpu_custom_call.1} parent=43 // pred_fallthru
          _
      $region44: #{tpu_custom_call.1} parent=5 // pred_fallthru
        _
    $region6: #{tpu_custom_call.1} parent=1 // loop_footer
      %s17 = sadd.s32 1, %s13
    $region7: #{tpu_custom_call.1} parent=1 // loop_footer_branch
      %12 = sbr.rel target = $region3
    $region8: #{tpu_custom_call.1} parent=1 // loop_exit
      _
    %526 = vsyncpa [#allocation3], 1
    %s527 = scalar_lea.sflag [#allocation3], 1
    %528 = vsyncpa %s527, 1

</llo_original>
